<compile_context>
chip_gen: v7x
topology: tpu7x:2x2x1
jax: 0.10.0
libtpu: 0.0.40
codegen_flags: <defaults>
</compile_context>

<pallas_src>
import jax
import jax.numpy as jnp
from jax.experimental import pallas as pl
from jax.experimental.pallas import tpu as pltpu


def _indrnn_kernel(w_ref, hh_ref, xcol_ref, hx_ref, o_ref):
    # w_ref    : (Cp, KKCp)  conv weight, bias folded into column KKC (f32 or bf16)
    # hh_ref   : (Cp, 1)     per-channel recurrent weight (f32)
    # xcol_ref : (KKCp, TM)  transposed im2col patches; row KKC is all-ones (bias row)
    # hx_ref   : (Cp, TM)    hidden-state slab (f32)
    # o_ref    : (Cp, TM)
    acc = jnp.dot(w_ref[...], xcol_ref[...], preferred_element_type=jnp.float32)
    out = acc + hh_ref[...] * hx_ref[...].astype(jnp.float32)
    o_ref[...] = jnp.maximum(out, 0.0).astype(o_ref.dtype)


def _round_up(x, m):
    return ((x + m - 1) // m) * m


def indrnn_cell_forward(x_nchw, hx_nchw, w_oikk, bias, hh, *, kernel_size,
                        dilation, tm=512, matmul_dtype=None):
    """IndRNNCell forward (conv_dim=2). Inputs/outputs are NCHW like PyTorch."""
    B, Cin, H, W = x_nchw.shape
    Chid = w_oikk.shape[0]
    K = kernel_size
    dil = dilation
    # dil*(K-1)//2 is 'same' padding only for odd K (matches PyTorch module usage).
    assert K % 2 == 1, "IndRNNCell kernel assumes odd kernel_size"
    pad = (dil * (K - 1)) // 2

    HW = H * W
    KKC = K * K * Cin
    # Contraction rows: KKC taps + 1 bias row, rounded to 16 so both f32 (8,128)
    # and bf16 (16,128) layouts are clean.  Channels pad only to a sublane
    # multiple (8), NOT to 128 lanes.
    KKCp = _round_up(KKC + 1, 16)
    Cp = _round_up(Chid, 8)

    if matmul_dtype is None:
        matmul_dtype = x_nchw.dtype

    # ---- wrapper-side im2col, already in the transposed (rows=taps, cols=M) layout ----
    # NCHW spatial pad; concatenating taps along the channel axis gives row index
    # tap*Cin + c, matching the (o, ky, kx, c) weight reshape below.
    x_pad = jnp.pad(x_nchw, ((0, 0), (0, 0), (pad, pad), (pad, pad)))
    taps = [
        x_pad[:, :, ky * dil:ky * dil + H, kx * dil:kx * dil + W]
        for ky in range(K) for kx in range(K)
    ]
    x_col = jnp.concatenate(taps, axis=1).reshape(B, KKC, HW)            # (B, KKC, HW)
    ones_row = jnp.ones((B, 1, HW), x_col.dtype)                         # bias row
    pad_rows = jnp.zeros((B, KKCp - KKC - 1, HW), x_col.dtype)
    x_col = jnp.concatenate([x_col, ones_row, pad_rows], axis=1)         # (B, KKCp, HW)
    x_col = x_col.astype(matmul_dtype)

    # Weight: (Chid, Cin, K, K) -> (Chid, K, K, Cin) -> (Chid, KKC); bias folded
    # into column KKC (multiplied by the all-ones row of x_col).
    w_flat = jnp.transpose(w_oikk, (0, 2, 3, 1)).reshape(Chid, KKC)
    w_full = jnp.concatenate(
        [w_flat, bias.reshape(Chid, 1),
         jnp.zeros((Chid, KKCp - KKC - 1), w_flat.dtype)], axis=1)        # (Chid, KKCp)
    w_full = jnp.pad(w_full, ((0, Cp - Chid), (0, 0))).astype(matmul_dtype)

    hh_col = jnp.pad(hh.reshape(Chid), (0, Cp - Chid)).reshape(Cp, 1)
    hh_col = hh_col.astype(jnp.float32)

    # hx / out keep their native NCHW-flattened layout: (B, Chid, HW) — no transpose.
    hx_flat = hx_nchw.reshape(B, Chid, HW)
    hx_flat = jnp.pad(hx_flat, ((0, 0), (0, Cp - Chid), (0, 0)))          # (B, Cp, HW)

    # Fixed lane tile: bounded VMEM (<~0.5 MiB double-buffered), enough grid
    # steps to pipeline, full MXU output columns (multiple of 256 when HW allows).
    TM = min(tm, HW)
    if TM != HW:
        TM = max(128, (TM // 128) * 128)
    n_m = pl.cdiv(HW, TM)

    out_flat = pl.pallas_call(
        _indrnn_kernel,
        out_shape=jax.ShapeDtypeStruct((B, Cp, HW), hx_nchw.dtype),
        grid_spec=pltpu.PrefetchScalarGridSpec(
            num_scalar_prefetch=0,
            grid=(B, n_m),
            in_specs=[
                pl.BlockSpec((Cp, KKCp), lambda b, j: (0, 0)),            # weight (+bias)
                pl.BlockSpec((Cp, 1), lambda b, j: (0, 0)),               # hh
                pl.BlockSpec((None, KKCp, TM), lambda b, j: (b, 0, j)),   # im2col^T
                pl.BlockSpec((None, Cp, TM), lambda b, j: (b, 0, j)),     # hx
            ],
            out_specs=pl.BlockSpec((None, Cp, TM), lambda b, j: (b, 0, j)),
        ),
        compiler_params=pltpu.CompilerParams(
            dimension_semantics=("parallel", "parallel"),
        ),
    )(w_full, hh_col, x_col, hx_flat)

    # (B, Cp, HW) -> drop padded channels -> (B, Chid, H, W).  No transpose needed.
    return out_flat[:, :Chid, :].reshape(B, Chid, H, W)


def _reference_forward(x, hx, w, b, hh, *, kernel_size, dilation):
    """Pure-JAX reference (lax.conv_general_dilated), NCHW."""
    pad = (dilation * (kernel_size - 1)) // 2
    conv = jax.lax.conv_general_dilated(
        x, w,
        window_strides=(1, 1),
        padding=((pad, pad), (pad, pad)),
        rhs_dilation=(dilation, dilation),
        dimension_numbers=("NCHW", "OIHW", "NCHW"),
    )
    conv = conv + b.reshape(1, -1, 1, 1)
    return jnp.maximum(conv + hh.reshape(1, -1, 1, 1) * hx, 0.0)


if __name__ == "__main__":
    # Module config (conv_dim=2 path).
    input_size = 4      # Cin
    hidden_size = 32    # Chid
    kernel_size = 3
    dilation = 1
    B, H, W = 2, 16, 16

    # TODO(synk): conv_dim=1/3 variants (Conv1d/Conv3d + the unsqueeze/permute
    # in forward) are not implemented; only the conv_dim=2 path is covered.

    key = jax.random.PRNGKey(0)
    k_x, k_h, k_w, k_b, k_hh = jax.random.split(key, 5)

    std = 1.0 / (hidden_size * (1 + kernel_size ** 2))
    # Deterministic synthetic params matching __init__ shapes. Bias is made
    # nonzero here so the bias-fold-into-matmul path is actually exercised.
    w = std * jax.random.normal(
        k_w, (hidden_size, input_size, kernel_size, kernel_size), jnp.float32)
    b = 0.01 * jax.random.normal(k_b, (hidden_size,), jnp.float32)
    hh = std * jax.random.normal(k_hh, (1, hidden_size, 1, 1), jnp.float32)

    x = jax.random.normal(k_x, (B, input_size, H, W), jnp.float32)
    hx = jax.random.normal(k_h, (B, hidden_size, H, W), jnp.float32)

    ref = _reference_forward(x, hx, w, b, hh,
                             kernel_size=kernel_size, dilation=dilation)

    # f32 matmul path (exact).
    out = indrnn_cell_forward(x, hx, w, b, hh,
                              kernel_size=kernel_size, dilation=dilation)
    out = jax.block_until_ready(out)
    assert out.shape == (B, hidden_size, H, W)
    assert jnp.allclose(out, ref, atol=1e-5, rtol=1e-5), "f32 mismatch vs JAX reference"

    # bf16 matmul-operand path (v6e/v7x HBM/MXU optimization); epilogue stays f32.
    out_bf16 = indrnn_cell_forward(x, hx, w, b, hh,
                                   kernel_size=kernel_size, dilation=dilation,
                                   matmul_dtype=jnp.bfloat16)
    out_bf16 = jax.block_until_ready(out_bf16)
    assert jnp.allclose(out_bf16, ref, atol=5e-3, rtol=5e-2), "bf16 mismatch vs JAX reference"

    print("KERNEL_OK")
</pallas_src>

<mosaic_0001>
module attributes {stable_mosaic.version = 11 : i64} {
  func.func @_indrnn_kernel(%arg0: i32, %arg1: i32, %arg2: memref<32x48xf32, #tpu.memory_space<vmem>>, %arg3: memref<32x1xf32, #tpu.memory_space<vmem>>, %arg4: memref<1x48x256xf32, #tpu.memory_space<vmem>>, %arg5: memref<1x32x256xf32, #tpu.memory_space<vmem>>, %arg6: memref<1x32x256xf32, #tpu.memory_space<vmem>>) attributes {dimension_semantics = [#tpu.dimension_semantics<parallel>, #tpu.dimension_semantics<parallel>], iteration_bounds = array<i64: 2, 1>, scalar_prefetch = 0 : i64, scratch_operands = 0 : i64, tpu.core_type = #tpu.core_type<tc>, window_params = [{pipeline_mode = #tpu.pipeline_mode<synchronous>, transform_indices = @transform_0, window_bounds = array<i64: 32, 48>}, {pipeline_mode = #tpu.pipeline_mode<synchronous>, transform_indices = @transform_1, window_bounds = array<i64: 32, 1>}, {transform_indices = @transform_2, window_bounds = array<i64: 1, 48, 256>}, {transform_indices = @transform_3, window_bounds = array<i64: 1, 32, 256>}, {transform_indices = @transform_4, window_bounds = array<i64: 1, 32, 256>}]} {
    %c0 = arith.constant 0 : index
    %c0_0 = arith.constant 0 : index
    %0 = vector.load %arg2[%c0, %c0_0] : memref<32x48xf32, #tpu.memory_space<vmem>>, vector<32x48xf32>
    %c0_1 = arith.constant 0 : index
    %c0_2 = arith.constant 0 : index
    %c0_3 = arith.constant 0 : index
    %1 = vector.load %arg4[%c0_1, %c0_2, %c0_3] : memref<1x48x256xf32, #tpu.memory_space<vmem>>, vector<1x48x256xf32>
    %2 = vector.shape_cast %1 : vector<1x48x256xf32> to vector<48x256xf32>
    %cst = arith.constant dense<0.000000e+00> : vector<32x256xf32>
    %3 = tpu.matmul %0, %2, %cst {dimension_numbers = #tpu.dot_dimension_numbers<[1], [0], [0], [1], [0, 0, 1, 1], [], []>} : vector<32x48xf32>, vector<48x256xf32>, vector<32x256xf32> -> vector<32x256xf32>
    %c0_4 = arith.constant 0 : index
    %c0_5 = arith.constant 0 : index
    %4 = vector.load %arg3[%c0_4, %c0_5] : memref<32x1xf32, #tpu.memory_space<vmem>>, vector<32x1xf32>
    %c0_6 = arith.constant 0 : index
    %c0_7 = arith.constant 0 : index
    %c0_8 = arith.constant 0 : index
    %5 = vector.load %arg5[%c0_6, %c0_7, %c0_8] : memref<1x32x256xf32, #tpu.memory_space<vmem>>, vector<1x32x256xf32>
    %6 = vector.shape_cast %5 : vector<1x32x256xf32> to vector<32x256xf32>
    %7 = vector.broadcast %4 : vector<32x1xf32> to vector<32x256xf32>
    %8 = arith.mulf %7, %6 : vector<32x256xf32>
    %9 = arith.addf %3, %8 : vector<32x256xf32>
    %cst_9 = arith.constant 0.000000e+00 : f32
    %10 = vector.broadcast %cst_9 : f32 to vector<32x256xf32>
    %11 = arith.maximumf %9, %10 : vector<32x256xf32>
    %c0_10 = arith.constant 0 : index
    %c0_11 = arith.constant 0 : index
    %c0_12 = arith.constant 0 : index
    %12 = vector.load %arg6[%c0_10, %c0_11, %c0_12] : memref<1x32x256xf32, #tpu.memory_space<vmem>>, vector<1x32x256xf32>
    %13 = vector.shape_cast %12 : vector<1x32x256xf32> to vector<32x256xf32>
    %14 = vector.shape_cast %11 : vector<32x256xf32> to vector<1x32x256xf32>
    tpu.vector_store %arg6[%c0_10, %c0_11, %c0_12], %14 {strides = array<i32>} : memref<1x32x256xf32, #tpu.memory_space<vmem>>, vector<1x32x256xf32>,
    return
  }
  func.func @transform_0(%arg0: i32, %arg1: i32) -> (i32, i32) {
    %c0_i32 = arith.constant 0 : i32
    %c0_i32_0 = arith.constant 0 : i32
    %c0_i32_1 = arith.constant 0 : i32
    return %c0_i32, %c0_i32_0 : i32, i32
  }
  func.func @transform_1(%arg0: i32, %arg1: i32) -> (i32, i32) {
    %c0_i32 = arith.constant 0 : i32
    %c0_i32_0 = arith.constant 0 : i32
    %c0_i32_1 = arith.constant 0 : i32
    return %c0_i32, %c0_i32_0 : i32, i32
  }
  func.func @transform_2(%arg0: i32, %arg1: i32) -> (i32, i32, i32) {
    %c0_i32 = arith.constant 0 : i32
    %c0_i32_0 = arith.constant 0 : i32
    return %arg0, %c0_i32, %arg1 : i32, i32, i32
  }
  func.func @transform_3(%arg0: i32, %arg1: i32) -> (i32, i32, i32) {
    %c0_i32 = arith.constant 0 : i32
    %c0_i32_0 = arith.constant 0 : i32
    return %arg0, %c0_i32, %arg1 : i32, i32, i32
  }
  func.func @transform_4(%arg0: i32, %arg1: i32) -> (i32, i32, i32) {
    %c0_i32 = arith.constant 0 : i32
    %c0_i32_0 = arith.constant 0 : i32
    return %arg0, %c0_i32, %arg1 : i32, i32, i32
  }
}

</mosaic_0001>

<llo_original>
// kernel: tpu_custom_call.1
$region0: #{tpu_custom_call.1}
  #allocation0 [shape = 'u32[]', space=smem, size = 0x4, offset = 0x4, fixed_abs, tag = 'smem constant byte address 0x4 - core index']
  #allocation1 [shape = 'u32[144,128]{1,0:T(1,128)}', space=vmem, size = 0x12000, scoped, tag = 'internal scratch']
  %s0 = inlined_call_operand.vmem [shape: f32[32,48], index: 0, kind: input, shape index: {}]
  %s1 = inlined_call_operand.vmem [shape: f32[32,1], index: 1, kind: input, shape index: {}]
  %s2 = inlined_call_operand.hbm [shape: f32[2,48,256], index: 2, kind: input, shape index: {}]
  %s3 = inlined_call_operand.hbm [shape: f32[2,32,256], index: 3, kind: input, shape index: {}]
  %s4 = inlined_call_operand.hbm [shape: f32[2,32,256], index: 4, kind: output, shape index: {}]
  %s5 = sld [smem:[#allocation0]]
  $region57: #{tpu_custom_call.1} parent=0
    _
  %s7 = ssub.s32 1, %s5
  %s8 = scalar_select 0, %s7, %s5
  $region1: #{tpu_custom_call.1} parent=0
    #allocation2 [shape = 'u8[98304]{0}', space=vmem, size = 0x18000, scoped, tag = 'input window, operand 2']
    #allocation3 [shape = 's32[2]{0}', space=sflag, size = 0x8, scoped, tag = 'scoped memory for tpu_custom_call.1']
    #allocation4 [shape = 's32[2]{0}', space=sflag, size = 0x8, scoped, tag = 'scoped memory for tpu_custom_call.1']
    #allocation5 [shape = 'u8[65536]{0}', space=vmem, size = 0x10000, scoped, tag = 'input window, operand 3']
    #allocation6 [shape = 's32[2]{0}', space=sflag, size = 0x8, scoped, tag = 'scoped memory for tpu_custom_call.1']
    #allocation7 [shape = 'u8[65536]{0}', space=vmem, size = 0x10000, scoped, tag = 'output window, operand 0']
    %9 = vsyncpa [#allocation3], 0
    %s10 = scalar_lea.sflag [#allocation3], 1
    %11 = vsyncpa %s10, 0
    %12 = vsyncpa [#allocation6], 0
    %s13 = scalar_lea.sflag [#allocation6], 1
    %14 = vsyncpa %s13, 0
    %15 = vsyncpa [#allocation4], 0
    %s16 = scalar_lea.sflag [#allocation4], 1
    %17 = vsyncpa %s16, 0
    loop: start=0, step=1, limit=4
    $region2: #{tpu_custom_call.1} parent=1 // loop_pre_header
      _
    $region3: #{tpu_custom_call.1} parent=1 // loop_header
      %s19 = sphi 0, %s23
      %p20 = scmp.ge.s32.totalorder %s19, 4
      %s26 = sphi 0, %s38
      %s27 = sphi 0, %s34
      %s28 = sphi 0, %s26
      %s29 = sphi 0, %s27
      %s30 = sphi 0, %s28
      %s31 = sphi 0, %s29
      %s39 = sphi 0, %s39
      %s41 = sphi 0, %s39
      %s42 = sphi 0, %s41
      %s56 = sphi 0, %s42
      %s60 = sphi 0, %s60
      %s62 = sphi 0, %s60
      %s63 = sphi 0, %s62
      %s77 = sphi 0, %s63
      %s85 = sphi 0, %s87
      %s88 = sphi 0, %s85
      %s89 = sphi 0, %s88
      %s105 = sphi 0, %s89
      %s113 = sphi 0, %s115
      %s116 = sphi 0, %s113
      %s117 = sphi 0, %s116
      %s133 = sphi 0, %s117
      %s141 = sphi 0, %s143
      %s144 = sphi 0, %s141
      %s145 = sphi 0, %s144
      %s161 = sphi 0, %s145
    $region4: #{tpu_custom_call.1} parent=1 // loop_header_branch
      %22 = sbr.rel (%p20) target = $region8
    $region5: #{tpu_custom_call.1} parent=1 // loop_body
      %s24 = ssub.s32 %s19, 1
      %s25 = ssub.s32 %s19, 2
      %s32 = sadd.s32 1, %s27
      %p33 = scmp.ge.s32.totalorder %s32, 1
      %s34 = scalar_select %p33, 0, %s32
      %s35 = sadd.s32 1, %s26
      %s36 = scalar_select %p33, %s35, %s26
      %p37 = scmp.ge.s32.totalorder %s36, 2
      %s38 = scalar_select %p37, 0, %s36
      %s40 = sadd.s32 %s39, 1
      %p43 = scmp.eq.s32.totalorder %s19, 1
      %p44 = scmp.ne.s32.totalorder %s39, %s41
      %p45 = scmp.eq.s32.totalorder %s19, 0
      %p46 = por %p44, %p45
      %p47 = scmp.ne.s32.totalorder %s39, %s41
      %p48 = scmp.eq.s32.totalorder %s24, 1
      %p49 = por %p47, %p48
      %p50 = scmp.ne.s32.totalorder %s41, %s42
      %p51 = scmp.eq.s32.totalorder %s24, 0
      %p52 = por %p50, %p51
      %p53 = scmp.ne.s32.totalorder %s41, %s42
      %p54 = scmp.eq.s32.totalorder %s25, 1
      %p55 = por %p53, %p54
      %p57 = scmp.ne.s32.totalorder %s42, %s56
      %p58 = scmp.eq.s32.totalorder %s25, 0
      %p59 = por %p57, %p58
      %s61 = sadd.s32 %s60, 1
      %p64 = scmp.eq.s32.totalorder %s19, 1
      %p65 = scmp.ne.s32.totalorder %s60, %s62
      %p66 = scmp.eq.s32.totalorder %s19, 0
      %p67 = por %p65, %p66
      %p68 = scmp.ne.s32.totalorder %s60, %s62
      %p69 = scmp.eq.s32.totalorder %s24, 1
      %p70 = por %p68, %p69
      %p71 = scmp.ne.s32.totalorder %s62, %s63
      %p72 = scmp.eq.s32.totalorder %s24, 0
      %p73 = por %p71, %p72
      %p74 = scmp.ne.s32.totalorder %s62, %s63
      %p75 = scmp.eq.s32.totalorder %s25, 1
      %p76 = por %p74, %p75
      %p78 = scmp.ne.s32.totalorder %s63, %s77
      %p79 = scmp.eq.s32.totalorder %s25, 0
      %p80 = por %p78, %p79
      %s81 = ssub.s32 %s26, %s38
      %s82 = ssub.s32 %s27, %s34
      %s83 = sor.u32 %s81, %s82
      %p84 = scmp.eq.s32.totalorder %s83, 0
      %s86 = sadd.s32 %s85, 1
      %s87 = scalar_select %p84, %s85, %s86
      %p90 = pneg %p84
      %p91 = scmp.eq.s32.totalorder %s19, 1
      %p92 = por %p90, %p91
      %p93 = scmp.ne.s32.totalorder %s85, %s88
      %p94 = scmp.eq.s32.totalorder %s19, 0
      %p95 = por %p93, %p94
      %p96 = scmp.ne.s32.totalorder %s85, %s88
      %p97 = scmp.eq.s32.totalorder %s24, 1
      %p98 = por %p96, %p97
      %p99 = scmp.ne.s32.totalorder %s88, %s89
      %p100 = scmp.eq.s32.totalorder %s24, 0
      %p101 = por %p99, %p100
      %p102 = scmp.ne.s32.totalorder %s88, %s89
      %p103 = scmp.eq.s32.totalorder %s25, 1
      %p104 = por %p102, %p103
      %p106 = scmp.ne.s32.totalorder %s89, %s105
      %p107 = scmp.eq.s32.totalorder %s25, 0
      %p108 = por %p106, %p107
      %s109 = ssub.s32 %s26, %s38
      %s110 = ssub.s32 %s27, %s34
      %s111 = sor.u32 %s109, %s110
      %p112 = scmp.eq.s32.totalorder %s111, 0
      %s114 = sadd.s32 %s113, 1
      %s115 = scalar_select %p112, %s113, %s114
      %p118 = pneg %p112
      %p119 = scmp.eq.s32.totalorder %s19, 1
      %p120 = por %p118, %p119
      %p121 = scmp.ne.s32.totalorder %s113, %s116
      %p122 = scmp.eq.s32.totalorder %s19, 0
      %p123 = por %p121, %p122
      %p124 = scmp.ne.s32.totalorder %s113, %s116
      %p125 = scmp.eq.s32.totalorder %s24, 1
      %p126 = por %p124, %p125
      %p127 = scmp.ne.s32.totalorder %s116, %s117
      %p128 = scmp.eq.s32.totalorder %s24, 0
      %p129 = por %p127, %p128
      %p130 = scmp.ne.s32.totalorder %s116, %s117
      %p131 = scmp.eq.s32.totalorder %s25, 1
      %p132 = por %p130, %p131
      %p134 = scmp.ne.s32.totalorder %s117, %s133
      %p135 = scmp.eq.s32.totalorder %s25, 0
      %p136 = por %p134, %p135
      %s137 = ssub.s32 %s26, %s38
      %s138 = ssub.s32 %s27, %s34
      %s139 = sor.u32 %s137, %s138
      %p140 = scmp.eq.s32.totalorder %s139, 0
      %s142 = sadd.s32 %s141, 1
      %s143 = scalar_select %p140, %s141, %s142
      %p146 = pneg %p140
      %p147 = scmp.eq.s32.totalorder %s19, 1
      %p148 = por %p146, %p147
      %p149 = scmp.ne.s32.totalorder %s141, %s144
      %p150 = scmp.eq.s32.totalorder %s19, 0
      %p151 = por %p149, %p150
      %p152 = scmp.ne.s32.totalorder %s141, %s144
      %p153 = scmp.eq.s32.totalorder %s24, 1
      %p154 = por %p152, %p153
      %p155 = scmp.ne.s32.totalorder %s144, %s145
      %p156 = scmp.eq.s32.totalorder %s24, 0
      %p157 = por %p155, %p156
      %p158 = scmp.ne.s32.totalorder %s144, %s145
      %p159 = scmp.eq.s32.totalorder %s25, 1
      %p160 = por %p158, %p159
      %p162 = scmp.ne.s32.totalorder %s145, %s161
      %p163 = scmp.eq.s32.totalorder %s25, 0
      %p164 = por %p162, %p163
      %p165 = scmp.le.s32.totalorder 1, %s19
      %p166 = scmp.lt.s32.totalorder %s19, 3
      %p167 = pnand %p165, %p166
      %p168 = pneg %p167
      // Predicated region
      $region9: #{tpu_custom_call.1} parent=5 // pred_check
        _
      $region10: #{tpu_custom_call.1} parent=5 // pred_check_branch
        %170 = sbr.rel (%p167) target = $region12
      $region11: #{tpu_custom_call.1} parent=5 // pred_region
        %s171 = ssub.s32 %s19, 1
        // Predicated region
        $region13: #{tpu_custom_call.1} parent=11 // pred_check
          %p172 = pneg %p52
        $region14: #{tpu_custom_call.1} parent=11 // pred_check_branch
          %174 = sbr.rel (%p172) target = $region16
        $region15: #{tpu_custom_call.1} parent=11 // pred_region
          _
        $region16: #{tpu_custom_call.1} parent=11 // pred_fallthru
          _
        // Predicated region
        $region17: #{tpu_custom_call.1} parent=11 // pred_check
          %p175 = pneg %p73
        $region18: #{tpu_custom_call.1} parent=11 // pred_check_branch
          %177 = sbr.rel (%p175) target = $region20
        $region19: #{tpu_custom_call.1} parent=11 // pred_region
          _
        $region20: #{tpu_custom_call.1} parent=11 // pred_fallthru
          _
      $region12: #{tpu_custom_call.1} parent=5 // pred_fallthru
        _
      %p178 = scmp.lt.s32.totalorder %s19, 2
      // Predicated region
      $region21: #{tpu_custom_call.1} parent=5 // pred_check
        %p179 = pneg %p178
      $region22: #{tpu_custom_call.1} parent=5 // pred_check_branch
        %181 = sbr.rel (%p179) target = $region24
      $region23: #{tpu_custom_call.1} parent=5 // pred_region
        // Predicated region
        $region25: #{tpu_custom_call.1} parent=23 // pred_check
          %p182 = pneg %p95
        $region26: #{tpu_custom_call.1} parent=23 // pred_check_branch
          %184 = sbr.rel (%p182) target = $region28
        $region27: #{tpu_custom_call.1} parent=23 // pred_region
          %s185 = sand.u32 %s85, 1
          %s186 = scalar_lea.sflag [#allocation3], %s185
          %s187 = sand.u32 %s85, 1
          %s188 = smul.addr %s187, 96
          %s189 = scalar_lea.vmem [#allocation2], %s188
          %s190 = smul.u32 2, %s27
          %s192 = ssub.s32 1536, 1536
          %193 = vsyncadd %s186, %s192
          %s194 = smul.addr %s26, 12
          %s195 = sadd.s32 %s190, %s194
          %s196 = smul.addr %s195, 128
          %s197 = scalar_lea.hbm %s2, %s196
          %s198 = sshll.u32 %s189, 4
          %s199 = int_to_ptr.vmem [resolvable:$true] %s198
          %204 = dma.hbm_to_vmem [thread:$0]  %s197, 1536, %s199, %s186, 256, 256, 16
        $region28: #{tpu_custom_call.1} parent=23 // pred_fallthru
          _
        // Predicated region
        $region29: #{tpu_custom_call.1} parent=23 // pred_check
          %p205 = pneg %p123
        $region30: #{tpu_custom_call.1} parent=23 // pred_check_branch
          %207 = sbr.rel (%p205) target = $region32
        $region31: #{tpu_custom_call.1} parent=23 // pred_region
          %s208 = sand.u32 %s113, 1
          %s209 = scalar_lea.sflag [#allocation6], %s208
          %s210 = sand.u32 %s113, 1
          %s211 = smul.addr %s210, 64
          %s212 = scalar_lea.vmem [#allocation5], %s211
          %s213 = smul.u32 2, %s27
          %s215 = ssub.s32 1024, 1024
          %216 = vsyncadd %s209, %s215
          %s217 = smul.addr %s26, 8
          %s218 = sadd.s32 %s213, %s217
          %s219 = smul.addr %s218, 128
          %s220 = scalar_lea.hbm %s3, %s219
          %s221 = sshll.u32 %s212, 4
          %s222 = int_to_ptr.vmem [resolvable:$true] %s221
          %227 = dma.hbm_to_vmem [thread:$0]  %s220, 1024, %s222, %s209, 256, 256, 16
        $region32: #{tpu_custom_call.1} parent=23 // pred_fallthru
          _
      $region24: #{tpu_custom_call.1} parent=5 // pred_fallthru
        _
      %p228 = scmp.le.s32.totalorder 1, %s19
      %p229 = scmp.lt.s32.totalorder %s19, 3
      %p230 = pnand %p228, %p229
      %p231 = pneg %p230
      // Predicated region
      $region33: #{tpu_custom_call.1} parent=5 // pred_check
        _
      $region34: #{tpu_custom_call.1} parent=5 // pred_check_branch
        %233 = sbr.rel (%p230) target = $region36
      $region35: #{tpu_custom_call.1} parent=5 // pred_region
        %s234 = ssub.s32 %s19, 1
        %s235 = sand.u32 %s88, 1
        %s236 = scalar_lea.sflag [#allocation3], %s235
        %s237 = sand.u32 %s88, 1
        %s238 = smul.addr %s237, 96
        %s239 = scalar_lea.vmem [#allocation2], %s238
        // Predicated region
        $region37: #{tpu_custom_call.1} parent=35 // pred_check
          %p240 = pneg %p101
        $region38: #{tpu_custom_call.1} parent=35 // pred_check_branch
          %242 = sbr.rel (%p240) target = $region40
        $region39: #{tpu_custom_call.1} parent=35 // pred_region
          %243 = dma.done %s236, 1536
        $region40: #{tpu_custom_call.1} parent=35 // pred_fallthru
          _
        %s244 = sand.u32 %s116, 1
        %s245 = scalar_lea.sflag [#allocation6], %s244
        %s246 = sand.u32 %s116, 1
        %s247 = smul.addr %s246, 64
        %s248 = scalar_lea.vmem [#allocation5], %s247
        // Predicated region
        $region41: #{tpu_custom_call.1} parent=35 // pred_check
          %p249 = pneg %p129
        $region42: #{tpu_custom_call.1} parent=35 // pred_check_branch
          %251 = sbr.rel (%p249) target = $region44
        $region43: #{tpu_custom_call.1} parent=35 // pred_region
          %252 = dma.done %s245, 1024
        $region44: #{tpu_custom_call.1} parent=35 // pred_fallthru
          _
        %p253 = pneg %p52
        %p254 = pneg %p49
        %p255 = pneg %p73
        %p256 = pneg %p70
        %s257 = sand.u32 %s88, 1
        %s258 = scalar_lea.sflag [#allocation3], %s257
        %s259 = sand.u32 %s88, 1
        %s260 = smul.addr %s259, 96
        %s261 = scalar_lea.vmem [#allocation2], %s260
        %p262 = pneg %p101
        %p263 = pneg %p98
        %s264 = sand.u32 %s116, 1
        %s265 = scalar_lea.sflag [#allocation6], %s264
        %s266 = sand.u32 %s116, 1
        %s267 = smul.addr %s266, 64
        %s268 = scalar_lea.vmem [#allocation5], %s267
        %p269 = pneg %p129
        %p270 = pneg %p126
        %p271 = pneg %p157
        %p272 = pneg %p154
        %s273 = sand.u32 %s144, 1
        %s274 = scalar_lea.sflag [#allocation4], %s273
        %s275 = sand.u32 %s144, 1
        %s276 = smul.addr %s275, 64
        %s277 = scalar_lea.vmem [#allocation7], %s276
        %s278 = smul.u32 2, %s29
        %s279 = smul.u32 2, %s29
        %s280 = smul.u32 2, %s29
        %v281 = vld [vmem:[%s0] sm:$0xff]
        %v282 = vld [vmem:[%s0 + $0x8] sm:$0xff]
        %v283 = vld [vmem:[%s0 + $0x10] sm:$0xff]
        %v284 = vld [vmem:[%s0 + $0x18] sm:$0xff]
        %v285 = vld [vmem:[%s239] sm:$0xff]
        %v286 = vld [vmem:[%s239 + $0x8] sm:$0xff]
        %v287 = vld [vmem:[%s239 + $0x10] sm:$0xff]
        %v288 = vld [vmem:[%s239 + $0x18] sm:$0xff]
        %v289 = vld [vmem:[%s239 + $0x20] sm:$0xff]
        %v290 = vld [vmem:[%s239 + $0x28] sm:$0xff]
        %v291 = vld [vmem:[%s239 + $0x30] sm:$0xff]
        %v292 = vld [vmem:[%s239 + $0x38] sm:$0xff]
        %v293 = vld [vmem:[%s239 + $0x40] sm:$0xff]
        %v294 = vld [vmem:[%s239 + $0x48] sm:$0xff]
        %v295 = vld [vmem:[%s239 + $0x50] sm:$0xff]
        %v296 = vld [vmem:[%s239 + $0x58] sm:$0xff]
        %v297 = vld [vmem:[%s1] sm:$0xff]
        %v298 = vld [vmem:[%s1 + $0x8] sm:$0xff]
        %v299 = vld [vmem:[%s1 + $0x10] sm:$0xff]
        %v300 = vld [vmem:[%s1 + $0x18] sm:$0xff]
        %v301 = vld [vmem:[%s248] sm:$0xff]
        %v302 = vld [vmem:[%s248 + $0x8] sm:$0xff]
        %v303 = vld [vmem:[%s248 + $0x10] sm:$0xff]
        %v304 = vld [vmem:[%s248 + $0x18] sm:$0xff]
        %v305 = vld [vmem:[%s248 + $0x20] sm:$0xff]
        %v306 = vld [vmem:[%s248 + $0x28] sm:$0xff]
        %v307 = vld [vmem:[%s248 + $0x30] sm:$0xff]
        %v308 = vld [vmem:[%s248 + $0x38] sm:$0xff]
        %310 = vset.pattern.permute.xlu0 0
        %311 = vperm.xlu0 %310, %v297
        %v312 = vpop.permute.xlu0 %311
        %315 = vset.pattern.permute.xlu0 0
        %316 = vperm.xlu0 %315, %v298
        %v317 = vpop.permute.xlu0 %316
        %320 = vset.pattern.permute.xlu0 0
        %321 = vperm.xlu0 %320, %v299
        %v322 = vpop.permute.xlu0 %321
        %325 = vset.pattern.permute.xlu0 0
        %326 = vperm.xlu0 %325, %v300
        %v327 = vpop.permute.xlu0 %326
        %v329 = vmul.f32 %v312, %v301
        %v330 = vmul.f32 %v312, %v302
        %v331 = vmul.f32 %v317, %v303
        %v332 = vmul.f32 %v317, %v304
        %v333 = vmul.f32 %v322, %v305
        %v334 = vmul.f32 %v322, %v306
        %v335 = vmul.f32 %v327, %v307
        %v336 = vmul.f32 %v327, %v308
        %vm337 = vcmask 392192
        %v339 = vsel %vm337, %v281, 0
        %v342 = vsel %vm337, %v282, 0
        %v345 = vsel %vm337, %v283, 0
        %v348 = vsel %vm337, %v284, 0
        %350 = vmatprep.subr.mxu0 %v286
        %351 = vmatpush1.msra.mxu0 %v285
        %352 = vmatprep.subr.mxu0 %v288
        %353 = vmatpush1.msra.mxu0 %v287
        %354 = vmatprep.subr.mxu0 %v290
        %355 = vmatpush1.msra.mxu0 %v289
        %356 = vmatprep.subr.mxu0 %v292
        %357 = vmatpush1.msra.mxu0 %v291
        %358 = vmatprep.subr.mxu0 %v294
        %359 = vmatpush1.msra.mxu0 %v293
        %360 = vmatprep.subr.mxu0 %v296
        %361 = vmatpush1.msra.mxu0 %v295
        %362 = vmatprep.subr.mxu0 0.0
        %363 = vmatpush1.msra.mxu0 0.0
        %364 = vmatprep.subr.mxu0 0.0
        %365 = vmatpush1.msra.mxu0 0.0
        %366 = vmatprep.subr.mxu0 0.0
        %367 = vmatpush1.msra.mxu0 0.0
        %368 = vmatprep.subr.mxu0 0.0
        %369 = vmatpush1.msra.mxu0 0.0
        %370 = vmatprep.subr.mxu0 0.0
        %371 = vmatpush1.msra.mxu0 0.0
        %372 = vmatprep.subr.mxu0 0.0
        %373 = vmatpush1.msra.mxu0 0.0
        %374 = vmatprep.subr.mxu0 0.0
        %375 = vmatpush1.msra.mxu0 0.0
        %376 = vmatprep.subr.mxu0 0.0
        %377 = vmatpush1.msra.mxu0 0.0
        %378 = vmatprep.subr.mxu0 0.0
        %379 = vmatpush1.msra.mxu0 0.0
        %380 = vmatprep.subr.mxu0 0.0
        %381 = vmatpush1.msra.mxu0 0.0
        %382 = vmatprep.subr.mxu0 0.0
        %383 = vmatpush1.msra.mxu0 0.0
        %384 = vmatprep.subr.mxu0 0.0
        %385 = vmatpush1.msra.mxu0 0.0
        %386 = vmatprep.subr.mxu0 0.0
        %387 = vmatpush1.msra.mxu0 0.0
        %388 = vmatprep.subr.mxu0 0.0
        %389 = vmatpush1.msra.mxu0 0.0
        %390 = vmatprep.subr.mxu0 0.0
        %391 = vmatpush1.msra.mxu0 0.0
        %392 = vmatprep.subr.mxu0 0.0
        %393 = vmatpush1.msra.mxu0 0.0
        %394 = vmatprep.subr.mxu0 0.0
        %395 = vmatpush1.msra.mxu0 0.0
        %396 = vmatprep.subr.mxu0 0.0
        %397 = vmatpush1.msra.mxu0 0.0
        %398 = vmatprep.subr.mxu0 0.0
        %399 = vmatpush1.msra.mxu0 0.0
        %400 = vmatprep.subr.mxu0 0.0
        %401 = vmatpush1.msra.mxu0 0.0
        %402 = vmatprep.subr.mxu0 0.0
        %403 = vmatpush1.msra.mxu0 0.0
        %404 = vmatprep.subr.mxu0 0.0
        %405 = vmatpush1.msra.mxu0 0.0
        %406 = vmatprep.subr.mxu0 0.0
        %407 = vmatpush1.msra.mxu0 0.0
        %408 = vmatprep.subr.mxu0 0.0
        %409 = vmatpush1.msra.mxu0 0.0
        %410 = vmatprep.subr.mxu0 0.0
        %411 = vmatpush1.msra.mxu0 0.0
        %412 = vmatprep.subr.mxu0 0.0
        %413 = vmatpush1.msra.mxu0 0.0
        %414 = vmatprep.mubr.f32.mxu0 0.0
        %415 = vmatmul.mubr.f32.gmra.mrb[0].mxu0 %v339
        %v416 = vpop.f32.mrb[0].mxu0
        %v417 = vadd.f32 %v329, %v416
        %v418 = vpop.f32.mrb[0].mxu0
        %v419 = vadd.f32 %v330, %v418
        %420 = vmatprep.mubr.f32.mxu0 0.0
        %421 = vmatmul.mubr.f32.gmra.mrb[0].mxu0 %v342
        %v422 = vpop.f32.mrb[0].mxu0
        %v423 = vadd.f32 %v331, %v422
        %v424 = vpop.f32.mrb[0].mxu0
        %v425 = vadd.f32 %v332, %v424
        %426 = vmatprep.mubr.f32.mxu0 0.0
        %427 = vmatmul.mubr.f32.gmra.mrb[0].mxu0 %v345
        %v428 = vpop.f32.mrb[0].mxu0
        %v429 = vadd.f32 %v333, %v428
        %v430 = vpop.f32.mrb[0].mxu0
        %v431 = vadd.f32 %v334, %v430
        %432 = vmatprep.mubr.f32.mxu0 0.0
        %433 = vmatmul.mubr.f32.gmra.mrb[0].mxu0 %v348
        %v434 = vpop.f32.mrb[0].mxu0
        %v435 = vadd.f32 %v335, %v434
        %v436 = vpop.f32.mrb[0].mxu0
        %v437 = vadd.f32 %v336, %v436
        %438 = vdwg.mxu0
        %v439 = vmax.f32 %v417, 0.0
        %v440 = vmax.f32 %v419, 0.0
        %v441 = vmax.f32 %v423, 0.0
        %v442 = vmax.f32 %v425, 0.0
        %v443 = vmax.f32 %v429, 0.0
        %v444 = vmax.f32 %v431, 0.0
        %v445 = vmax.f32 %v435, 0.0
        %v446 = vmax.f32 %v437, 0.0
        %447 = vst [vmem:[%s277] sm:$0xff] %v439
        %448 = vst [vmem:[%s277 + $0x8] sm:$0xff] %v440
        %449 = vst [vmem:[%s277 + $0x10] sm:$0xff] %v441
        %450 = vst [vmem:[%s277 + $0x18] sm:$0xff] %v442
        %451 = vst [vmem:[%s277 + $0x20] sm:$0xff] %v443
        %452 = vst [vmem:[%s277 + $0x28] sm:$0xff] %v444
        %453 = vst [vmem:[%s277 + $0x30] sm:$0xff] %v445
        %454 = vst [vmem:[%s277 + $0x38] sm:$0xff] %v446
        %s455 = sand.u32 %s144, 1
        %s456 = scalar_lea.sflag [#allocation4], %s455
        %s457 = sand.u32 %s144, 1
        %s458 = smul.addr %s457, 64
        %s459 = scalar_lea.vmem [#allocation7], %s458
        // Predicated region
        $region45: #{tpu_custom_call.1} parent=35 // pred_check
          %p460 = pneg %p154
        $region46: #{tpu_custom_call.1} parent=35 // pred_check_branch
          %462 = sbr.rel (%p460) target = $region48
        $region47: #{tpu_custom_call.1} parent=35 // pred_region
          %s463 = smul.u32 2, %s29
          %s465 = ssub.s32 1024, 1024
          %466 = vsyncadd %s456, %s465
          %s467 = smul.addr %s28, 8
          %s468 = sadd.s32 %s463, %s467
          %s469 = smul.addr %s468, 128
          %s470 = scalar_lea.hbm %s4, %s469
          %s471 = sshll.u32 %s459, 4
          %s472 = int_to_ptr.vmem [resolvable:$true] %s471
          %477 = dma.vmem_to_hbm [thread:$0]  %s472, 1024, %s470, %s456, 256, 256, 16
        $region48: #{tpu_custom_call.1} parent=35 // pred_fallthru
          _
      $region36: #{tpu_custom_call.1} parent=5 // pred_fallthru
        _
      %p478 = scmp.le.s32.totalorder 2, %s19
      // Predicated region
      $region49: #{tpu_custom_call.1} parent=5 // pred_check
        %p479 = pneg %p478
      $region50: #{tpu_custom_call.1} parent=5 // pred_check_branch
        %481 = sbr.rel (%p479) target = $region52
      $region51: #{tpu_custom_call.1} parent=5 // pred_region
        %s482 = ssub.s32 %s19, 2
        // Predicated region
        $region53: #{tpu_custom_call.1} parent=51 // pred_check
          %p483 = pneg %p160
        $region54: #{tpu_custom_call.1} parent=51 // pred_check_branch
          %485 = sbr.rel (%p483) target = $region56
        $region55: #{tpu_custom_call.1} parent=51 // pred_region
          %s486 = sand.u32 %s145, 1
          %s487 = scalar_lea.sflag [#allocation4], %s486
          %s488 = sand.u32 %s145, 1
          %s489 = smul.addr %s488, 64
          %s490 = scalar_lea.vmem [#allocation7], %s489
          %491 = dma.done %s487, 1024
        $region56: #{tpu_custom_call.1} parent=51 // pred_fallthru
          _
      $region52: #{tpu_custom_call.1} parent=5 // pred_fallthru
        _
    $region6: #{tpu_custom_call.1} parent=1 // loop_footer
      %s23 = sadd.s32 1, %s19
    $region7: #{tpu_custom_call.1} parent=1 // loop_footer_branch
      %18 = sbr.rel target = $region3
    $region8: #{tpu_custom_call.1} parent=1 // loop_exit
      _
    %492 = vsyncpa [#allocation3], 1
    %s493 = scalar_lea.sflag [#allocation3], 1
    %494 = vsyncpa %s493, 1
    %495 = vsyncpa [#allocation6], 1
    %s496 = scalar_lea.sflag [#allocation6], 1
    %497 = vsyncpa %s496, 1
    %498 = vsyncpa [#allocation4], 1
    %s499 = scalar_lea.sflag [#allocation4], 1
    %500 = vsyncpa %s499, 1

</llo_original>
